<compile_context>
chip_gen: v7x
topology: tpu7x:2x2x1
jax: 0.10.0
libtpu: 0.0.40
codegen_flags: <defaults>
</compile_context>

<pallas_src>
import jax
import jax.numpy as jnp
from jax.experimental import pallas as pl
from jax.experimental.pallas import tpu as pltpu

HIDDEN = 300          # logical hidden size of the module
HIDDEN_PAD = 384      # padded to a multiple of 128 lanes
OUT_DIM = 3           # logical output width
OUT_PAD = 128         # lane-dense padded output width
BN_EPS = 1e-5


def _round_up(a, b):
    return (a + b - 1) // b * b


def _make_kernel(act_bf16):
    def kernel(x_ref, w1_ref, b_ref, w2_ref, o_ref):
        # Cast the f32 input tile to bf16 in-kernel (no extra host-side pass).
        x = x_ref[...].astype(jnp.bfloat16)
        # fc: [TN, D] bf16 @ [D, Hp] bf16 -> f32 accumulate (MXU)
        h = jnp.dot(x, w1_ref[...], preferred_element_type=jnp.float32)
        if act_bf16:
            # v6e / v7x: bf16 VALU -> halve VALU work and h's vreg footprint.
            hb = h.astype(jnp.bfloat16) + b_ref[0:1, :].astype(jnp.bfloat16)
            h = jnp.maximum(hb, 0.0)
        else:
            # v5e: no bf16 VALU path; bias + ReLU in f32, cast for the MXU.
            h = jnp.maximum(h + b_ref[0:1, :], 0.0).astype(jnp.bfloat16)
        # out1 (eval BN folded in): [TN, Hp] bf16 @ [Hp, 128] bf16 -> f32 acc
        out = jnp.dot(h, w2_ref[...], preferred_element_type=jnp.float32)
        out = out + b_ref[1:2, :o_ref.shape[-1]]
        # dropout(p=0.3, training=False) is identity; lane-dense bf16 store.
        o_ref[...] = out.astype(o_ref.dtype)
    return kernel


def _use_bf16_activations():
    """bf16 bias/ReLU path only where the VPU has bf16 (v6e / v7x)."""
    try:
        kind = jax.devices()[0].device_kind.lower()
    except Exception:
        return False
    return any(tag in kind for tag in ("v6", "v7", "tpu7"))


def _choose_batch_tile(n):
    """Batch tile: full array for small N; for large N split ~in half so the
    grid has >= 2 'parallel' steps (v7x megacore), capped at 4096 rows."""
    if n <= 256:
        return n                      # block dims == array dims: always legal
    return max(16, min(4096, _round_up(-(-n // 2), 16)))


def prepare_params(raw_params):
    """Fold eval-mode BN into out1, pad to MXU-friendly shapes, cast to bf16.

    Call at param-load time (the BN fold depends on running stats).
    Returns (w1p [D,Hp] bf16, bias [2,Hp] f32, w2p [Hp,128] bf16).
    """
    w1, b1, gamma, beta, mean, var, w2, b2 = raw_params
    D, H = w1.shape
    out_dim = w2.shape[1]

    # BN(eval) after ReLU:  bn(r) = scale*r + shift ;  out1(bn(r)) = r @ w2' + b2'
    scale = gamma * jax.lax.rsqrt(var + BN_EPS)         # [1, H]
    shift = beta - mean * scale                         # [1, H]
    w2_f = w2 * scale.reshape(H, 1)                     # [H, out_dim]
    b2_f = b2 + shift @ w2                              # [1, out_dim]

    # Pad hidden H -> HIDDEN_PAD and output out_dim -> OUT_PAD with zeros.
    # (Zero padding keeps output lanes 3..127 exactly zero.)
    w1p = jnp.zeros((D, HIDDEN_PAD), jnp.float32).at[:, :H].set(w1)
    w2p = jnp.zeros((HIDDEN_PAD, OUT_PAD), jnp.float32).at[:H, :out_dim].set(w2_f)
    bias = jnp.zeros((2, HIDDEN_PAD), jnp.float32)
    bias = bias.at[0, :H].set(b1[0]).at[1, :out_dim].set(b2_f[0])

    return (w1p.astype(jnp.bfloat16), bias, w2p.astype(jnp.bfloat16))


def fc_classifier_forward(x, packed_params, act_bf16=None):
    """x: [N, D] float32. Returns [N, 3] float32 (matches .view(-1, 3))."""
    w1p, bias, w2p = packed_params
    N, D = x.shape
    Hp = w1p.shape[1]
    Op = w2p.shape[1]
    if act_bf16 is None:
        act_bf16 = _use_bf16_activations()

    TN = _choose_batch_tile(N)
    grid = (pl.cdiv(N, TN),)

    cost = pl.CostEstimate(
        flops=2 * N * (D * Hp + Hp * Op),
        transcendentals=0,
        bytes_accessed=(N * D * 4            # x read, f32
                        + D * Hp * 2         # w1 bf16
                        + Hp * Op * 2        # w2 bf16
                        + 2 * Hp * 4         # stacked biases f32
                        + N * Op * 2),       # out write, bf16
    )

    out = pl.pallas_call(
        _make_kernel(act_bf16),
        out_shape=jax.ShapeDtypeStruct((N, Op), jnp.bfloat16),
        grid=grid,
        in_specs=[
            pl.BlockSpec((TN, D), lambda i: (i, 0)),     # x: tiled over batch (f32)
            pl.BlockSpec((D, Hp), lambda i: (0, 0)),     # w1: VMEM-resident
            pl.BlockSpec((2, Hp), lambda i: (0, 0)),     # stacked biases: resident
            pl.BlockSpec((Hp, Op), lambda i: (0, 0)),    # w2 (BN folded): resident
        ],
        out_specs=pl.BlockSpec((TN, Op), lambda i: (i, 0)),
        compiler_params=pltpu.CompilerParams(
            dimension_semantics=("parallel",),
            vmem_limit_bytes=48 * 1024 * 1024,           # safe on v7x's 64 MiB VMEM
        ),
        cost_estimate=cost,
    )(x, w1p, bias, w2p)

    # Drop lane padding; forward ends with .view(-1, 3).
    return out[:, :OUT_DIM].astype(jnp.float32).reshape(-1, OUT_DIM)


def init_params(key, input_dim, hidden=HIDDEN, out_dim=OUT_DIM):
    """Deterministic parameters matching the PyTorch module's shapes."""
    k1, k2, k3, k4 = jax.random.split(key, 4)
    bound1 = 1.0 / jnp.sqrt(input_dim)
    w1 = jax.random.uniform(k1, (input_dim, hidden), jnp.float32, -bound1, bound1)
    b1 = jax.random.uniform(k2, (1, hidden), jnp.float32, -bound1, bound1)
    # BatchNorm1d defaults: gamma=1, beta=0, running_mean=0, running_var=1
    gamma = jnp.ones((1, hidden), jnp.float32)
    beta = jnp.zeros((1, hidden), jnp.float32)
    mean = jnp.zeros((1, hidden), jnp.float32)
    var = jnp.ones((1, hidden), jnp.float32)
    bound2 = 1.0 / jnp.sqrt(hidden)
    w2 = jax.random.uniform(k3, (hidden, out_dim), jnp.float32, -bound2, bound2)
    b2 = jax.random.uniform(k4, (1, out_dim), jnp.float32, -bound2, bound2)
    return (w1, b1, gamma, beta, mean, var, w2, b2)


if __name__ == "__main__":
    key = jax.random.PRNGKey(0)
    kx, kp = jax.random.split(key)

    batch = 8          # N
    input_dim = 32     # input_size[1]
    x = jax.random.normal(kx, (batch, input_dim), jnp.float32)

    raw = init_params(kp, input_dim)
    packed = prepare_params(raw)

    out = fc_classifier_forward(x, packed)
    out = jax.block_until_ready(out)
    assert out.shape == (batch, OUT_DIM)

    # Pure-JAX f32 reference (un-folded, un-padded). Kernel uses bf16 MXU
    # operands with f32 accumulation and a bf16 output store -> loose tolerance.
    w1, b1, gamma, beta, mean, var, w2, b2 = raw
    h = jnp.maximum(x @ w1 + b1, 0.0)
    h = (h - mean) * jax.lax.rsqrt(var + BN_EPS) * gamma + beta
    ref = h @ w2 + b2
    assert jnp.allclose(out, ref, atol=5e-2, rtol=5e-2), (
        float(jnp.max(jnp.abs(out - ref))))

    print("KERNEL_OK")
</pallas_src>

<mosaic_0001>
module attributes {stable_mosaic.version = 11 : i64} {
  func.func @kernel(%arg0: i32, %arg1: memref<8x32xf32, #tpu.memory_space<vmem>>, %arg2: memref<32x384xbf16, #tpu.memory_space<vmem>>, %arg3: memref<2x384xf32, #tpu.memory_space<vmem>>, %arg4: memref<384x128xbf16, #tpu.memory_space<vmem>>, %arg5: memref<8x128xbf16, #tpu.memory_space<vmem>>) attributes {dimension_semantics = [#tpu.dimension_semantics<parallel>], iteration_bounds = array<i64: 1>, scalar_prefetch = 0 : i64, scratch_operands = 0 : i64, tpu.core_type = #tpu.core_type<tc>, window_params = [{transform_indices = @transform_0, window_bounds = array<i64: 8, 32>}, {pipeline_mode = #tpu.pipeline_mode<synchronous>, transform_indices = @transform_1, window_bounds = array<i64: 32, 384>}, {pipeline_mode = #tpu.pipeline_mode<synchronous>, transform_indices = @transform_2, window_bounds = array<i64: 2, 384>}, {pipeline_mode = #tpu.pipeline_mode<synchronous>, transform_indices = @transform_3, window_bounds = array<i64: 384, 128>}, {transform_indices = @transform_4, window_bounds = array<i64: 8, 128>}]} {
    %c0 = arith.constant 0 : index
    %c0_0 = arith.constant 0 : index
    %0 = vector.load %arg1[%c0, %c0_0] : memref<8x32xf32, #tpu.memory_space<vmem>>, vector<8x32xf32>
    %1 = arith.truncf %0 : vector<8x32xf32> to vector<8x32xbf16>
    %c0_1 = arith.constant 0 : index
    %c0_2 = arith.constant 0 : index
    %2 = vector.load %arg2[%c0_1, %c0_2] : memref<32x384xbf16, #tpu.memory_space<vmem>>, vector<32x384xbf16>
    %cst = arith.constant dense<0.000000e+00> : vector<8x384xf32>
    %3 = tpu.matmul %1, %2, %cst {dimension_numbers = #tpu.dot_dimension_numbers<[1], [0], [0], [1], [0, 0, 1, 1], [], []>} : vector<8x32xbf16>, vector<32x384xbf16>, vector<8x384xf32> -> vector<8x384xf32>
    %c0_3 = arith.constant 0 : index
    %c0_4 = arith.constant 0 : index
    %4 = vector.load %arg3[%c0_3, %c0_4] : memref<2x384xf32, #tpu.memory_space<vmem>>, vector<1x384xf32>
    %5 = vector.broadcast %4 : vector<1x384xf32> to vector<8x384xf32>
    %6 = arith.addf %3, %5 : vector<8x384xf32>
    %cst_5 = arith.constant 0.000000e+00 : f32
    %7 = vector.broadcast %cst_5 : f32 to vector<8x384xf32>
    %8 = arith.maximumf %6, %7 : vector<8x384xf32>
    %9 = arith.truncf %8 : vector<8x384xf32> to vector<8x384xbf16>
    %c0_6 = arith.constant 0 : index
    %c0_7 = arith.constant 0 : index
    %10 = vector.load %arg4[%c0_6, %c0_7] : memref<384x128xbf16, #tpu.memory_space<vmem>>, vector<384x128xbf16>
    %cst_8 = arith.constant dense<0.000000e+00> : vector<8x128xf32>
    %11 = tpu.matmul %9, %10, %cst_8 {dimension_numbers = #tpu.dot_dimension_numbers<[1], [0], [0], [1], [0, 0, 1, 1], [], []>} : vector<8x384xbf16>, vector<384x128xbf16>, vector<8x128xf32> -> vector<8x128xf32>
    %c1 = arith.constant 1 : index
    %c0_9 = arith.constant 0 : index
    %12 = vector.load %arg3[%c1, %c0_9] : memref<2x384xf32, #tpu.memory_space<vmem>>, vector<1x128xf32>
    %13 = vector.broadcast %12 : vector<1x128xf32> to vector<8x128xf32>
    %14 = arith.addf %11, %13 : vector<8x128xf32>
    %15 = arith.truncf %14 : vector<8x128xf32> to vector<8x128xbf16>
    %c0_10 = arith.constant 0 : index
    %c0_11 = arith.constant 0 : index
    %16 = vector.load %arg5[%c0_10, %c0_11] : memref<8x128xbf16, #tpu.memory_space<vmem>>, vector<8x128xbf16>
    tpu.vector_store %arg5[%c0_10, %c0_11], %15 {strides = array<i32>} : memref<8x128xbf16, #tpu.memory_space<vmem>>, vector<8x128xbf16>,
    return
  }
  func.func @transform_0(%arg0: i32) -> (i32, i32) {
    %c0_i32 = arith.constant 0 : i32
    %c0_i32_0 = arith.constant 0 : i32
    return %arg0, %c0_i32 : i32, i32
  }
  func.func @transform_1(%arg0: i32) -> (i32, i32) {
    %c0_i32 = arith.constant 0 : i32
    %c0_i32_0 = arith.constant 0 : i32
    %c0_i32_1 = arith.constant 0 : i32
    return %c0_i32, %c0_i32_0 : i32, i32
  }
  func.func @transform_2(%arg0: i32) -> (i32, i32) {
    %c0_i32 = arith.constant 0 : i32
    %c0_i32_0 = arith.constant 0 : i32
    %c0_i32_1 = arith.constant 0 : i32
    return %c0_i32, %c0_i32_0 : i32, i32
  }
  func.func @transform_3(%arg0: i32) -> (i32, i32) {
    %c0_i32 = arith.constant 0 : i32
    %c0_i32_0 = arith.constant 0 : i32
    %c0_i32_1 = arith.constant 0 : i32
    return %c0_i32, %c0_i32_0 : i32, i32
  }
  func.func @transform_4(%arg0: i32) -> (i32, i32) {
    %c0_i32 = arith.constant 0 : i32
    %c0_i32_0 = arith.constant 0 : i32
    return %arg0, %c0_i32 : i32, i32
  }
}

</mosaic_0001>

<llo_original>
// kernel: tpu_custom_call.1
$region0: #{tpu_custom_call.1}
  #allocation0 [shape = 'u32[]', space=smem, size = 0x4, offset = 0x4, fixed_abs, tag = 'smem constant byte address 0x4 - core index']
  #allocation1 [shape = 'u32[144,128]{1,0:T(1,128)}', space=vmem, size = 0x12000, scoped, tag = 'internal scratch']
  %s0 = inlined_call_operand.hbm [shape: f32[8,32], index: 0, kind: input, shape index: {}]
  %s1 = inlined_call_operand.hbm [shape: bf16[32,384], index: 1, kind: input, shape index: {}]
  %s2 = inlined_call_operand.vmem [shape: f32[2,384], index: 2, kind: input, shape index: {}]
  %s3 = inlined_call_operand.hbm [shape: bf16[384,128], index: 3, kind: input, shape index: {}]
  %s4 = inlined_call_operand.hbm [shape: bf16[8,128], index: 4, kind: output, shape index: {}]
  %s5 = sld [smem:[#allocation0]]
  $region38: #{tpu_custom_call.1} parent=0
    _
  %s7 = ssub.s32 1, %s5
  %s8 = scalar_select 0, %s7, %s5
  $region1: #{tpu_custom_call.1} parent=0
    #allocation2 [shape = 'u8[4096]{0}', space=vmem, size = 0x1000, scoped, tag = 'input window, operand 0, single buffered']
    #allocation3 [shape = 's32[1]{0}', space=sflag, size = 0x4, scoped, tag = 'scoped memory for tpu_custom_call.1']
    #allocation4 [shape = 's32[1]{0}', space=sflag, size = 0x4, scoped, tag = 'scoped memory for tpu_custom_call.1']
    #allocation5 [shape = 'u8[24576]{0}', space=vmem, size = 0x6000, scoped, tag = 'input window, operand 1, single buffered']
    #allocation6 [shape = 's32[1]{0}', space=sflag, size = 0x4, scoped, tag = 'scoped memory for tpu_custom_call.1']
    #allocation7 [shape = 'u8[98304]{0}', space=vmem, size = 0x18000, scoped, tag = 'input window, operand 3, single buffered']
    #allocation8 [shape = 'u8[2048]{0}', space=vmem, size = 0x800, scoped, tag = 'output window, operand 0, single buffered']
    %9 = vsyncpa [#allocation3], 0
    %10 = vsyncpa [#allocation6], 0
    %11 = vsyncpa [#allocation4], 0
    // Predicated region
    $region2: #{tpu_custom_call.1} parent=1 // pred_check
      _
    $region3: #{tpu_custom_call.1} parent=1 // pred_check_branch
      %13 = sbr.rel (0) target = $region5
    $region4: #{tpu_custom_call.1} parent=1 // pred_region
      %s15 = ssub.s32 128, 128
      %16 = vsyncadd [#allocation3], %s15
      %s18 = sshll.u32 [#allocation2], 4
      %s19 = int_to_ptr.vmem [resolvable:$true] %s18
      %21 = dma.hbm_to_vmem [thread:$0]  %s0, 128, %s19, [#allocation3]
    $region5: #{tpu_custom_call.1} parent=1 // pred_fallthru
      _
    // Predicated region
    $region6: #{tpu_custom_call.1} parent=1 // pred_check
      _
    $region7: #{tpu_custom_call.1} parent=1 // pred_check_branch
      %23 = sbr.rel (0) target = $region9
    $region8: #{tpu_custom_call.1} parent=1 // pred_region
      %s25 = ssub.s32 768, 768
      %26 = vsyncadd [#allocation6], %s25
      %s27 = sshll.u32 [#allocation5], 4
      %s28 = int_to_ptr.vmem [resolvable:$true] %s27
      %33 = dma.hbm_to_vmem [thread:$0]  %s1, 768, %s28, [#allocation6], 192, 192, 12
    $region9: #{tpu_custom_call.1} parent=1 // pred_fallthru
      _
    // Predicated region
    $region10: #{tpu_custom_call.1} parent=1 // pred_check
      _
    $region11: #{tpu_custom_call.1} parent=1 // pred_check_branch
      %35 = sbr.rel (0) target = $region13
    $region12: #{tpu_custom_call.1} parent=1 // pred_region
      _
    $region13: #{tpu_custom_call.1} parent=1 // pred_fallthru
      _
    // Predicated region
    $region14: #{tpu_custom_call.1} parent=1 // pred_check
      _
    $region15: #{tpu_custom_call.1} parent=1 // pred_check_branch
      %37 = sbr.rel (0) target = $region17
    $region16: #{tpu_custom_call.1} parent=1 // pred_region
      %s39 = ssub.s32 3072, 3072
      %40 = vsyncadd [#allocation6], %s39
      %s41 = sshll.u32 [#allocation7], 4
      %s42 = int_to_ptr.vmem [resolvable:$true] %s41
      %47 = dma.hbm_to_vmem [thread:$0]  %s3, 3072, %s42, [#allocation6], 64, 64, 4
    $region17: #{tpu_custom_call.1} parent=1 // pred_fallthru
      _
    // Predicated region
    $region18: #{tpu_custom_call.1} parent=1 // pred_check
      _
    $region19: #{tpu_custom_call.1} parent=1 // pred_check_branch
      %49 = sbr.rel (0) target = $region21
    $region20: #{tpu_custom_call.1} parent=1 // pred_region
      %50 = dma.done [#allocation3], 128
    $region21: #{tpu_custom_call.1} parent=1 // pred_fallthru
      _
    // Predicated region
    $region22: #{tpu_custom_call.1} parent=1 // pred_check
      _
    $region23: #{tpu_custom_call.1} parent=1 // pred_check_branch
      %52 = sbr.rel (0) target = $region25
    $region24: #{tpu_custom_call.1} parent=1 // pred_region
      %53 = dma.done [#allocation6], 768
    $region25: #{tpu_custom_call.1} parent=1 // pred_fallthru
      _
    // Predicated region
    $region26: #{tpu_custom_call.1} parent=1 // pred_check
      _
    $region27: #{tpu_custom_call.1} parent=1 // pred_check_branch
      %55 = sbr.rel (0) target = $region29
    $region28: #{tpu_custom_call.1} parent=1 // pred_region
      %56 = dma.done [#allocation6], 3072
    $region29: #{tpu_custom_call.1} parent=1 // pred_fallthru
      _
    %v58 = vld [vmem:[#allocation2] sm:$0xff]
    %v59 = vpack.c.bf16 %v58, %v58
    %v60 = vld [vmem:[#allocation5] sm:$0xff]
    %v61 = vld [vmem:[#allocation5 + $0x8] sm:$0xf]
    %v62 = vld [vmem:[#allocation5 + $0xc] sm:$0xff]
    %v63 = vld [vmem:[#allocation5 + $0x14] sm:$0xf]
    %v64 = vld [vmem:[#allocation5 + $0x18] sm:$0xff]
    %v65 = vld [vmem:[#allocation5 + $0x20] sm:$0xf]
    %v66 = vld [vmem:[#allocation5 + $0x24] sm:$0xff]
    %v67 = vld [vmem:[#allocation5 + $0x2c] sm:$0xf]
    %v68 = vld [vmem:[%s2] ss:$2 sm:$0x7]
    %v70 = vlaneseq
    %v71 = vshrl.u32 %v70, 7
    %v72 = vsub.s32 0, %v71
    %v73 = vrot.slane %v68, %v72
    %v74 = vlaneseq
    %v75 = vshrl.u32 %v74, 7
    %v76 = vsub.s32 1, %v75
    %v77 = vrot.slane %v68, %v76
    %v78 = vlaneseq
    %v79 = vshrl.u32 %v78, 7
    %v80 = vsub.s32 2, %v79
    %v81 = vrot.slane %v68, %v80
    %v93 = vunpack.c.l.b16 %v60
    %v94 = vunpack.c.h.b16 %v60
    %v95 = vunpack.c.l.b16 %v61
    %v96 = vunpack.c.l.b16 %v62
    %v97 = vunpack.c.h.b16 %v62
    %v98 = vunpack.c.l.b16 %v63
    %v99 = vunpack.c.l.b16 %v64
    %v100 = vunpack.c.h.b16 %v64
    %v101 = vunpack.c.l.b16 %v65
    %v102 = vunpack.c.l.b16 %v66
    %v103 = vunpack.c.h.b16 %v66
    %v104 = vunpack.c.l.b16 %v67
    %v105 = vpack.c.b16 %v96, %v93
    %v106 = vpack.c.b16 %v97, %v94
    %v107 = vpack.c.b16 %v98, %v95
    %v108 = vpack.c.b16 %v102, %v99
    %v109 = vpack.c.b16 %v103, %v100
    %v110 = vpack.c.b16 %v104, %v101
    %vm117 = vcmask 261120
    %v119 = vsel %vm117, %v59, 0
    %121 = vmatprep.subr.bf16.mxu0 %v106
    %122 = vmatpush1.bf16.msra.mxu0 %v105
    %123 = vmatprep.subr.bf16.mxu0 %v109
    %124 = vmatpush1.bf16.msra.mxu0 %v108
    %125 = vmatprep.subr.bf16.mxu0 0
    %126 = vmatpush1.bf16.msra.mxu0 0
    %127 = vmatprep.subr.bf16.mxu0 0
    %128 = vmatpush1.bf16.msra.mxu0 0
    %129 = vmatprep.subr.bf16.mxu0 0
    %130 = vmatpush1.bf16.msra.mxu0 0
    %131 = vmatprep.subr.bf16.mxu0 0
    %132 = vmatpush1.bf16.msra.mxu0 0
    %133 = vmatprep.subr.bf16.mxu0 0
    %134 = vmatpush1.bf16.msra.mxu0 0
    %135 = vmatprep.subr.bf16.mxu0 0
    %136 = vmatpush1.bf16.msra.mxu0 0
    %137 = vmatprep.subr.bf16.mxu0 0
    %138 = vmatpush1.bf16.msra.mxu0 0
    %139 = vmatprep.subr.bf16.mxu0 0
    %140 = vmatpush1.bf16.msra.mxu0 0
    %141 = vmatprep.subr.bf16.mxu0 0
    %142 = vmatpush1.bf16.msra.mxu0 0
    %143 = vmatprep.subr.bf16.mxu0 0
    %144 = vmatpush1.bf16.msra.mxu0 0
    %145 = vmatprep.subr.bf16.mxu0 0
    %146 = vmatpush1.bf16.msra.mxu0 0
    %147 = vmatprep.subr.bf16.mxu0 0
    %148 = vmatpush1.bf16.msra.mxu0 0
    %149 = vmatprep.subr.bf16.mxu0 0
    %150 = vmatpush1.bf16.msra.mxu0 0
    %151 = vmatprep.subr.bf16.mxu0 0
    %152 = vmatpush1.bf16.msra.mxu0 0
    %153 = vmatprep.mubr.bf16.mxu0 0
    %154 = vmatmul.mubr.bf16.gmra.mrb[0].mxu0 %v119
    %v155 = vpop.f32.mrb[0].mxu0
    %v156 = vadd.f32 %v73, %v155
    %v157 = vpop.f32.mrb[0].mxu0
    %v158 = vadd.f32 %v77, %v157
    %v159 = vpop.f32.mrb[0].mxu0
    %v160 = vpop.f32.mrb[0].mxu0
    %161 = vdwg.mxu0
    %162 = vmatprep.subr.bf16.mxu0 0
    %163 = vmatpush1.bf16.msra.mxu0 %v107
    %164 = vmatprep.subr.bf16.mxu0 0
    %165 = vmatpush1.bf16.msra.mxu0 %v110
    %166 = vmatprep.subr.bf16.mxu0 0
    %167 = vmatpush1.bf16.msra.mxu0 0
    %168 = vmatprep.subr.bf16.mxu0 0
    %169 = vmatpush1.bf16.msra.mxu0 0
    %170 = vmatprep.subr.bf16.mxu0 0
    %171 = vmatpush1.bf16.msra.mxu0 0
    %172 = vmatprep.subr.bf16.mxu0 0
    %173 = vmatpush1.bf16.msra.mxu0 0
    %174 = vmatprep.subr.bf16.mxu0 0
    %175 = vmatpush1.bf16.msra.mxu0 0
    %176 = vmatprep.subr.bf16.mxu0 0
    %177 = vmatpush1.bf16.msra.mxu0 0
    %178 = vmatprep.subr.bf16.mxu0 0
    %179 = vmatpush1.bf16.msra.mxu0 0
    %180 = vmatprep.subr.bf16.mxu0 0
    %181 = vmatpush1.bf16.msra.mxu0 0
    %182 = vmatprep.subr.bf16.mxu0 0
    %183 = vmatpush1.bf16.msra.mxu0 0
    %184 = vmatprep.subr.bf16.mxu0 0
    %185 = vmatpush1.bf16.msra.mxu0 0
    %186 = vmatprep.subr.bf16.mxu0 0
    %187 = vmatpush1.bf16.msra.mxu0 0
    %188 = vmatprep.subr.bf16.mxu0 0
    %189 = vmatpush1.bf16.msra.mxu0 0
    %190 = vmatprep.subr.bf16.mxu0 0
    %191 = vmatpush1.bf16.msra.mxu0 0
    %192 = vmatprep.subr.bf16.mxu0 0
    %193 = vmatpush1.bf16.msra.mxu0 0
    %194 = vmatprep.mubr.bf16.mxu0 0
    %195 = vmatmul.mubr.bf16.gmra.mrb[0].mxu0 %v119
    %v196 = vpop.f32.mrb[0].mxu0
    %v197 = vadd.f32 %v81, %v196
    %v198 = vpop.f32.mrb[0].mxu0
    %v199 = vpop.f32.mrb[0].mxu0
    %v200 = vpop.f32.mrb[0].mxu0
    %201 = vdwg.mxu0
    %v202 = vmax.f32 %v156, 0.0
    %v203 = vmax.f32 %v158, 0.0
    %v204 = vmax.f32 %v197, 0.0
    %v205 = vpack.c.bf16 %v202, %v202
    %v206 = vpack.c.bf16 %v203, %v203
    %v207 = vpack.c.bf16 %v204, %v204
    %v208 = vld [vmem:[#allocation7] sm:$0xf]
    %v209 = vld [vmem:[#allocation7 + $0x4] sm:$0xf]
    %v210 = vld [vmem:[#allocation7 + $0x8] sm:$0xf]
    %v211 = vld [vmem:[#allocation7 + $0xc] sm:$0xf]
    %v212 = vld [vmem:[#allocation7 + $0x10] sm:$0xf]
    %v213 = vld [vmem:[#allocation7 + $0x14] sm:$0xf]
    %v214 = vld [vmem:[#allocation7 + $0x18] sm:$0xf]
    %v215 = vld [vmem:[#allocation7 + $0x1c] sm:$0xf]
    %v216 = vld [vmem:[#allocation7 + $0x20] sm:$0xf]
    %v217 = vld [vmem:[#allocation7 + $0x24] sm:$0xf]
    %v218 = vld [vmem:[#allocation7 + $0x28] sm:$0xf]
    %v219 = vld [vmem:[#allocation7 + $0x2c] sm:$0xf]
    %v220 = vld [vmem:[#allocation7 + $0x30] sm:$0xf]
    %v221 = vld [vmem:[#allocation7 + $0x34] sm:$0xf]
    %v222 = vld [vmem:[#allocation7 + $0x38] sm:$0xf]
    %v223 = vld [vmem:[#allocation7 + $0x3c] sm:$0xf]
    %v224 = vld [vmem:[#allocation7 + $0x40] sm:$0xf]
    %v225 = vld [vmem:[#allocation7 + $0x44] sm:$0xf]
    %v226 = vld [vmem:[#allocation7 + $0x48] sm:$0xf]
    %v227 = vld [vmem:[#allocation7 + $0x4c] sm:$0xf]
    %v228 = vld [vmem:[#allocation7 + $0x50] sm:$0xf]
    %v229 = vld [vmem:[#allocation7 + $0x54] sm:$0xf]
    %v230 = vld [vmem:[#allocation7 + $0x58] sm:$0xf]
    %v231 = vld [vmem:[#allocation7 + $0x5c] sm:$0xf]
    %v232 = vld [vmem:[#allocation7 + $0x60] sm:$0xf]
    %v233 = vld [vmem:[#allocation7 + $0x64] sm:$0xf]
    %v234 = vld [vmem:[#allocation7 + $0x68] sm:$0xf]
    %v235 = vld [vmem:[#allocation7 + $0x6c] sm:$0xf]
    %v236 = vld [vmem:[#allocation7 + $0x70] sm:$0xf]
    %v237 = vld [vmem:[#allocation7 + $0x74] sm:$0xf]
    %v238 = vld [vmem:[#allocation7 + $0x78] sm:$0xf]
    %v239 = vld [vmem:[#allocation7 + $0x7c] sm:$0xf]
    %v240 = vld [vmem:[#allocation7 + $0x80] sm:$0xf]
    %v241 = vld [vmem:[#allocation7 + $0x84] sm:$0xf]
    %v242 = vld [vmem:[#allocation7 + $0x88] sm:$0xf]
    %v243 = vld [vmem:[#allocation7 + $0x8c] sm:$0xf]
    %v244 = vld [vmem:[#allocation7 + $0x90] sm:$0xf]
    %v245 = vld [vmem:[#allocation7 + $0x94] sm:$0xf]
    %v246 = vld [vmem:[#allocation7 + $0x98] sm:$0xf]
    %v247 = vld [vmem:[#allocation7 + $0x9c] sm:$0xf]
    %v248 = vld [vmem:[#allocation7 + $0xa0] sm:$0xf]
    %v249 = vld [vmem:[#allocation7 + $0xa4] sm:$0xf]
    %v250 = vld [vmem:[#allocation7 + $0xa8] sm:$0xf]
    %v251 = vld [vmem:[#allocation7 + $0xac] sm:$0xf]
    %v252 = vld [vmem:[#allocation7 + $0xb0] sm:$0xf]
    %v253 = vld [vmem:[#allocation7 + $0xb4] sm:$0xf]
    %v254 = vld [vmem:[#allocation7 + $0xb8] sm:$0xf]
    %v255 = vld [vmem:[#allocation7 + $0xbc] sm:$0xf]
    %v256 = vld [vmem:[%s2 + $0x1] sm:$0x1]
    %v257 = vlaneseq
    %v258 = vshrl.u32 %v257, 7
    %v259 = vsub.s32 0, %v258
    %v260 = vrot.slane %v256, %v259
    %v309 = vunpack.c.l.b16 %v208
    %v310 = vunpack.c.l.b16 %v209
    %v311 = vunpack.c.l.b16 %v210
    %v312 = vunpack.c.l.b16 %v211
    %v313 = vunpack.c.l.b16 %v212
    %v314 = vunpack.c.l.b16 %v213
    %v315 = vunpack.c.l.b16 %v214
    %v316 = vunpack.c.l.b16 %v215
    %v317 = vunpack.c.l.b16 %v216
    %v318 = vunpack.c.l.b16 %v217
    %v319 = vunpack.c.l.b16 %v218
    %v320 = vunpack.c.l.b16 %v219
    %v321 = vunpack.c.l.b16 %v220
    %v322 = vunpack.c.l.b16 %v221
    %v323 = vunpack.c.l.b16 %v222
    %v324 = vunpack.c.l.b16 %v223
    %v325 = vunpack.c.l.b16 %v224
    %v326 = vunpack.c.l.b16 %v225
    %v327 = vunpack.c.l.b16 %v226
    %v328 = vunpack.c.l.b16 %v227
    %v329 = vunpack.c.l.b16 %v228
    %v330 = vunpack.c.l.b16 %v229
    %v331 = vunpack.c.l.b16 %v230
    %v332 = vunpack.c.l.b16 %v231
    %v333 = vunpack.c.l.b16 %v232
    %v334 = vunpack.c.l.b16 %v233
    %v335 = vunpack.c.l.b16 %v234
    %v336 = vunpack.c.l.b16 %v235
    %v337 = vunpack.c.l.b16 %v236
    %v338 = vunpack.c.l.b16 %v237
    %v339 = vunpack.c.l.b16 %v238
    %v340 = vunpack.c.l.b16 %v239
    %v341 = vunpack.c.l.b16 %v240
    %v342 = vunpack.c.l.b16 %v241
    %v343 = vunpack.c.l.b16 %v242
    %v344 = vunpack.c.l.b16 %v243
    %v345 = vunpack.c.l.b16 %v244
    %v346 = vunpack.c.l.b16 %v245
    %v347 = vunpack.c.l.b16 %v246
    %v348 = vunpack.c.l.b16 %v247
    %v349 = vunpack.c.l.b16 %v248
    %v350 = vunpack.c.l.b16 %v249
    %v351 = vunpack.c.l.b16 %v250
    %v352 = vunpack.c.l.b16 %v251
    %v353 = vunpack.c.l.b16 %v252
    %v354 = vunpack.c.l.b16 %v253
    %v355 = vunpack.c.l.b16 %v254
    %v356 = vunpack.c.l.b16 %v255
    %v357 = vpack.c.b16 %v310, %v309
    %v358 = vpack.c.b16 %v312, %v311
    %v359 = vpack.c.b16 %v314, %v313
    %v360 = vpack.c.b16 %v316, %v315
    %v361 = vpack.c.b16 %v318, %v317
    %v362 = vpack.c.b16 %v320, %v319
    %v363 = vpack.c.b16 %v322, %v321
    %v364 = vpack.c.b16 %v324, %v323
    %v365 = vpack.c.b16 %v326, %v325
    %v366 = vpack.c.b16 %v328, %v327
    %v367 = vpack.c.b16 %v330, %v329
    %v368 = vpack.c.b16 %v332, %v331
    %v369 = vpack.c.b16 %v334, %v333
    %v370 = vpack.c.b16 %v336, %v335
    %v371 = vpack.c.b16 %v338, %v337
    %v372 = vpack.c.b16 %v340, %v339
    %v373 = vpack.c.b16 %v342, %v341
    %v374 = vpack.c.b16 %v344, %v343
    %v375 = vpack.c.b16 %v346, %v345
    %v376 = vpack.c.b16 %v348, %v347
    %v377 = vpack.c.b16 %v350, %v349
    %v378 = vpack.c.b16 %v352, %v351
    %v379 = vpack.c.b16 %v354, %v353
    %v380 = vpack.c.b16 %v356, %v355
    %405 = vmatprep.subr.bf16.mxu0 0
    %406 = vmatpush1.bf16.msra.mxu0 %v357
    %407 = vmatprep.subr.bf16.mxu0 0
    %408 = vmatpush1.bf16.msra.mxu0 %v358
    %409 = vmatprep.subr.bf16.mxu0 0
    %410 = vmatpush1.bf16.msra.mxu0 %v359
    %411 = vmatprep.subr.bf16.mxu0 0
    %412 = vmatpush1.bf16.msra.mxu0 %v360
    %413 = vmatprep.subr.bf16.mxu0 0
    %414 = vmatpush1.bf16.msra.mxu0 %v361
    %415 = vmatprep.subr.bf16.mxu0 0
    %416 = vmatpush1.bf16.msra.mxu0 %v362
    %417 = vmatprep.subr.bf16.mxu0 0
    %418 = vmatpush1.bf16.msra.mxu0 %v363
    %419 = vmatprep.subr.bf16.mxu0 0
    %420 = vmatpush1.bf16.msra.mxu0 %v364
    %421 = vmatprep.subr.bf16.mxu0 0
    %422 = vmatpush1.bf16.msra.mxu0 %v365
    %423 = vmatprep.subr.bf16.mxu0 0
    %424 = vmatpush1.bf16.msra.mxu0 %v366
    %425 = vmatprep.subr.bf16.mxu0 0
    %426 = vmatpush1.bf16.msra.mxu0 %v367
    %427 = vmatprep.subr.bf16.mxu0 0
    %428 = vmatpush1.bf16.msra.mxu0 %v368
    %429 = vmatprep.subr.bf16.mxu0 0
    %430 = vmatpush1.bf16.msra.mxu0 %v369
    %431 = vmatprep.subr.bf16.mxu0 0
    %432 = vmatpush1.bf16.msra.mxu0 %v370
    %433 = vmatprep.subr.bf16.mxu0 0
    %434 = vmatpush1.bf16.msra.mxu0 %v371
    %435 = vmatprep.subr.bf16.mxu0 0
    %436 = vmatpush1.bf16.msra.mxu0 %v372
    %437 = vmatprep.mubr.bf16.mxu0 %v206
    %438 = vmatmul.mubr.bf16.gmra.mrb[0].mxu0 %v205
    %v439 = vpop.f32.mrb[0].mxu0
    %v440 = vadd.f32 %v260, %v439
    %v441 = vpop.f32.mrb[0].mxu0
    %v442 = vpop.f32.mrb[0].mxu0
    %v443 = vpop.f32.mrb[0].mxu0
    %444 = vdwg.mxu0
    %445 = vmatprep.subr.bf16.mxu0 0
    %446 = vmatpush1.bf16.msra.mxu0 %v373
    %447 = vmatprep.subr.bf16.mxu0 0
    %448 = vmatpush1.bf16.msra.mxu0 %v374
    %449 = vmatprep.subr.bf16.mxu0 0
    %450 = vmatpush1.bf16.msra.mxu0 %v375
    %451 = vmatprep.subr.bf16.mxu0 0
    %452 = vmatpush1.bf16.msra.mxu0 %v376
    %453 = vmatprep.subr.bf16.mxu0 0
    %454 = vmatpush1.bf16.msra.mxu0 %v377
    %455 = vmatprep.subr.bf16.mxu0 0
    %456 = vmatpush1.bf16.msra.mxu0 %v378
    %457 = vmatprep.subr.bf16.mxu0 0
    %458 = vmatpush1.bf16.msra.mxu0 %v379
    %459 = vmatprep.subr.bf16.mxu0 0
    %460 = vmatpush1.bf16.msra.mxu0 %v380
    %461 = vmatprep.subr.bf16.mxu0 0
    %462 = vmatpush1.bf16.msra.mxu0 0
    %463 = vmatprep.subr.bf16.mxu0 0
    %464 = vmatpush1.bf16.msra.mxu0 0
    %465 = vmatprep.subr.bf16.mxu0 0
    %466 = vmatpush1.bf16.msra.mxu0 0
    %467 = vmatprep.subr.bf16.mxu0 0
    %468 = vmatpush1.bf16.msra.mxu0 0
    %469 = vmatprep.subr.bf16.mxu0 0
    %470 = vmatpush1.bf16.msra.mxu0 0
    %471 = vmatprep.subr.bf16.mxu0 0
    %472 = vmatpush1.bf16.msra.mxu0 0
    %473 = vmatprep.subr.bf16.mxu0 0
    %474 = vmatpush1.bf16.msra.mxu0 0
    %475 = vmatprep.subr.bf16.mxu0 0
    %476 = vmatpush1.bf16.msra.mxu0 0
    %477 = vmatprep.mubr.bf16.mxu0 0
    %478 = vmatmul.mubr.bf16.gmra.mrb[0].mxu0 %v207
    %v479 = vpop.f32.mrb[0].mxu0
    %v480 = vadd.f32 %v440, %v479
    %v481 = vpop.f32.mrb[0].mxu0
    %v482 = vpop.f32.mrb[0].mxu0
    %v483 = vpop.f32.mrb[0].mxu0
    %484 = vdwg.mxu0
    %v485 = vpack.c.bf16 %v480, %v480
    %486 = vst [vmem:[#allocation8] sm:$0xf] %v485
    // Predicated region
    $region30: #{tpu_custom_call.1} parent=1 // pred_check
      _
    $region31: #{tpu_custom_call.1} parent=1 // pred_check_branch
      %488 = sbr.rel (0) target = $region33
    $region32: #{tpu_custom_call.1} parent=1 // pred_region
      %s490 = ssub.s32 64, 64
      %491 = vsyncadd [#allocation4], %s490
      %s493 = sshll.u32 [#allocation8], 4
      %s494 = int_to_ptr.vmem [resolvable:$true] %s493
      %496 = dma.vmem_to_hbm [thread:$0]  %s494, 64, %s4, [#allocation4]
    $region33: #{tpu_custom_call.1} parent=1 // pred_fallthru
      _
    // Predicated region
    $region34: #{tpu_custom_call.1} parent=1 // pred_check
      _
    $region35: #{tpu_custom_call.1} parent=1 // pred_check_branch
      %498 = sbr.rel (0) target = $region37
    $region36: #{tpu_custom_call.1} parent=1 // pred_region
      %499 = dma.done [#allocation4], 64
    $region37: #{tpu_custom_call.1} parent=1 // pred_fallthru
      _
    %500 = vsyncpa [#allocation3], 1
    %501 = vsyncpa [#allocation6], 1
    %502 = vsyncpa [#allocation4], 1

</llo_original>
